<compile_context>
chip_gen: v6e
topology: v6e:2x2x1
jax: 0.10.0
libtpu: 0.0.40
codegen_flags: <defaults>
</compile_context>

<pallas_src>
import functools

import jax
import jax.numpy as jnp
from jax.experimental import pallas as pl
from jax.experimental.pallas import tpu as pltpu

_LANE = 128      # TPU lane width (last dim)
_SUBLANE = 8     # f32 sublane width (second-last dim)


def _round_up(x: int, m: int) -> int:
    return ((x + m - 1) // m) * m


def _mlp_kernel(x_ref, w1_ref, b1_ref, w2_ref, b2_ref, o_ref):
    # x:  (TB, F)      w1: (F, Hp)   b1: (1, Hp)
    # w2: (Hp, Op)     b2: (1, Op)   o:  (TB, Op)
    x = x_ref[...]
    h = jnp.dot(x, w1_ref[...], preferred_element_type=jnp.float32) + b1_ref[...]
    h = jnp.maximum(h, 0.0)  # ReLU
    y = jnp.dot(h, w2_ref[...], preferred_element_type=jnp.float32) + b2_ref[...]
    o_ref[...] = y.astype(o_ref.dtype)


def prepare_params(w1, b1, w2, b2):
    """One-time parameter prep (outside the hot path).

    Takes PyTorch Linear layout:
      w1: (n_hidden, n_feature), b1: (n_hidden,)
      w2: (n_output, n_hidden),  b2: (n_output,)
    Returns weights transposed to (in, out) and zero-padded so the hidden and
    output dims are multiples of 128 lanes.
    """
    H, F = w1.shape
    O = w2.shape[0]
    Hp = _round_up(H, _LANE)
    Op = _round_up(O, _LANE)

    w1_t = jnp.zeros((F, Hp), jnp.float32).at[:, :H].set(w1.T.astype(jnp.float32))
    b1_p = jnp.zeros((1, Hp), jnp.float32).at[:, :H].set(b1.astype(jnp.float32))
    w2_t = jnp.zeros((Hp, Op), jnp.float32).at[:H, :O].set(w2.T.astype(jnp.float32))
    b2_p = jnp.zeros((1, Op), jnp.float32).at[:, :O].set(b2.astype(jnp.float32))
    return (w1_t, b1_p, w2_t, b2_p)


def _net_forward_impl(x, padded_params, n_output):
    w1_t, b1_p, w2_t, b2_p = padded_params
    B, F = x.shape
    Hp = w1_t.shape[1]
    Op = w2_t.shape[1]

    # Batch tile: as large as reasonable, multiple of the f32 sublane (8),
    # capped at 256 (MXU M dim on v6e/v7x; multiple of 128 for v5e).
    TB = min(256, _round_up(B, _SUBLANE))
    B_pad = _round_up(B, TB)
    if B_pad != B:
        x = jnp.pad(x, ((0, B_pad - B), (0, 0)))

    grid = (B_pad // TB,)

    flops = 2 * B_pad * (F * Hp + Hp * Op)
    bytes_accessed = 4 * (
        B_pad * F + F * Hp + Hp + Hp * Op + Op + B_pad * Op
    )

    out = pl.pallas_call(
        _mlp_kernel,
        out_shape=jax.ShapeDtypeStruct((B_pad, Op), jnp.float32),
        grid=grid,
        in_specs=[
            pl.BlockSpec((TB, F), lambda i: (i, 0)),      # x: streamed batch tiles
            pl.BlockSpec((F, Hp), lambda i: (0, 0)),      # w1: resident
            pl.BlockSpec((1, Hp), lambda i: (0, 0)),      # b1: resident
            pl.BlockSpec((Hp, Op), lambda i: (0, 0)),     # w2: resident
            pl.BlockSpec((1, Op), lambda i: (0, 0)),      # b2: resident
        ],
        out_specs=pl.BlockSpec((TB, Op), lambda i: (i, 0)),
        compiler_params=pltpu.CompilerParams(
            dimension_semantics=("parallel",),            # megacore sharding on v7x
            vmem_limit_bytes=32 * 1024 * 1024,            # safe on v5e/v6e/v7x
        ),
        cost_estimate=pl.CostEstimate(
            flops=flops, transcendentals=0, bytes_accessed=bytes_accessed
        ),
    )(x, w1_t, b1_p, w2_t, b2_p)

    # Slice off batch padding and padded output lanes.
    return out[:B, :n_output]


net_forward = jax.jit(_net_forward_impl, static_argnums=(2,))


def _reference(x, w1, b1, w2, b2):
    h = jnp.maximum(x @ w1.T + b1, 0.0)
    return h @ w2.T + b2


if __name__ == "__main__":
    # Small shapes consistent with the module: Net(n_feature=16, n_hidden=32, n_output=1)
    B, n_feature, n_hidden, n_output = 8, 16, 32, 1

    key = jax.random.PRNGKey(0)
    k1, k2, k3, k4, k5 = jax.random.split(key, 5)

    # Deterministic param init mimicking PyTorch Linear's U(-1/sqrt(in), 1/sqrt(in)).
    bound1 = 1.0 / jnp.sqrt(jnp.float32(n_feature))
    bound2 = 1.0 / jnp.sqrt(jnp.float32(n_hidden))
    w1 = jax.random.uniform(k1, (n_hidden, n_feature), jnp.float32, -bound1, bound1)
    b1 = jax.random.uniform(k2, (n_hidden,), jnp.float32, -bound1, bound1)
    w2 = jax.random.uniform(k3, (n_output, n_hidden), jnp.float32, -bound2, bound2)
    b2 = jax.random.uniform(k4, (n_output,), jnp.float32, -bound2, bound2)

    x = jax.random.normal(k5, (B, n_feature), jnp.float32)

    # One-time weight prep (transpose + lane padding), then the fused kernel.
    padded_params = prepare_params(w1, b1, w2, b2)
    y = net_forward(x, padded_params, n_output)
    jax.block_until_ready(y)

    y_ref = _reference(x, w1, b1, w2, b2)
    assert y.shape == (B, n_output)
    assert jnp.allclose(y, y_ref, atol=1e-5, rtol=1e-5), "mismatch vs reference"

    print("KERNEL_OK")
</pallas_src>

<mosaic_0001>
module attributes {stable_mosaic.version = 11 : i64} {
  func.func @_mlp_kernel(%arg0: i32, %arg1: memref<8x16xf32, #tpu.memory_space<vmem>>, %arg2: memref<16x128xf32, #tpu.memory_space<vmem>>, %arg3: memref<1x128xf32, #tpu.memory_space<vmem>>, %arg4: memref<128x128xf32, #tpu.memory_space<vmem>>, %arg5: memref<1x128xf32, #tpu.memory_space<vmem>>, %arg6: memref<8x128xf32, #tpu.memory_space<vmem>>) attributes {dimension_semantics = [#tpu.dimension_semantics<parallel>], iteration_bounds = array<i64: 1>, scalar_prefetch = 0 : i64, scratch_operands = 0 : i64, tpu.core_type = #tpu.core_type<tc>, window_params = [{transform_indices = @transform_0, window_bounds = array<i64: 8, 16>}, {pipeline_mode = #tpu.pipeline_mode<synchronous>, transform_indices = @transform_1, window_bounds = array<i64: 16, 128>}, {pipeline_mode = #tpu.pipeline_mode<synchronous>, transform_indices = @transform_2, window_bounds = array<i64: 1, 128>}, {pipeline_mode = #tpu.pipeline_mode<synchronous>, transform_indices = @transform_3, window_bounds = array<i64: 128, 128>}, {pipeline_mode = #tpu.pipeline_mode<synchronous>, transform_indices = @transform_4, window_bounds = array<i64: 1, 128>}, {transform_indices = @transform_5, window_bounds = array<i64: 8, 128>}]} {
    %c0 = arith.constant 0 : index
    %c0_0 = arith.constant 0 : index
    %0 = vector.load %arg1[%c0, %c0_0] : memref<8x16xf32, #tpu.memory_space<vmem>>, vector<8x16xf32>
    %c0_1 = arith.constant 0 : index
    %c0_2 = arith.constant 0 : index
    %1 = vector.load %arg2[%c0_1, %c0_2] : memref<16x128xf32, #tpu.memory_space<vmem>>, vector<16x128xf32>
    %cst = arith.constant dense<0.000000e+00> : vector<8x128xf32>
    %2 = tpu.matmul %0, %1, %cst {dimension_numbers = #tpu.dot_dimension_numbers<[1], [0], [0], [1], [0, 0, 1, 1], [], []>} : vector<8x16xf32>, vector<16x128xf32>, vector<8x128xf32> -> vector<8x128xf32>
    %c0_3 = arith.constant 0 : index
    %c0_4 = arith.constant 0 : index
    %3 = vector.load %arg3[%c0_3, %c0_4] : memref<1x128xf32, #tpu.memory_space<vmem>>, vector<1x128xf32>
    %4 = vector.broadcast %3 : vector<1x128xf32> to vector<8x128xf32>
    %5 = arith.addf %2, %4 : vector<8x128xf32>
    %cst_5 = arith.constant 0.000000e+00 : f32
    %6 = vector.broadcast %cst_5 : f32 to vector<8x128xf32>
    %7 = arith.maximumf %5, %6 : vector<8x128xf32>
    %c0_6 = arith.constant 0 : index
    %c0_7 = arith.constant 0 : index
    %8 = vector.load %arg4[%c0_6, %c0_7] : memref<128x128xf32, #tpu.memory_space<vmem>>, vector<128x128xf32>
    %cst_8 = arith.constant dense<0.000000e+00> : vector<8x128xf32>
    %9 = tpu.matmul %7, %8, %cst_8 {dimension_numbers = #tpu.dot_dimension_numbers<[1], [0], [0], [1], [0, 0, 1, 1], [], []>} : vector<8x128xf32>, vector<128x128xf32>, vector<8x128xf32> -> vector<8x128xf32>
    %c0_9 = arith.constant 0 : index
    %c0_10 = arith.constant 0 : index
    %10 = vector.load %arg5[%c0_9, %c0_10] : memref<1x128xf32, #tpu.memory_space<vmem>>, vector<1x128xf32>
    %11 = vector.broadcast %10 : vector<1x128xf32> to vector<8x128xf32>
    %12 = arith.addf %9, %11 : vector<8x128xf32>
    %c0_11 = arith.constant 0 : index
    %c0_12 = arith.constant 0 : index
    %13 = vector.load %arg6[%c0_11, %c0_12] : memref<8x128xf32, #tpu.memory_space<vmem>>, vector<8x128xf32>
    tpu.vector_store %arg6[%c0_11, %c0_12], %12 {strides = array<i32>} : memref<8x128xf32, #tpu.memory_space<vmem>>, vector<8x128xf32>,
    return
  }
  func.func @transform_0(%arg0: i32) -> (i32, i32) {
    %c0_i32 = arith.constant 0 : i32
    %c0_i32_0 = arith.constant 0 : i32
    return %arg0, %c0_i32 : i32, i32
  }
  func.func @transform_1(%arg0: i32) -> (i32, i32) {
    %c0_i32 = arith.constant 0 : i32
    %c0_i32_0 = arith.constant 0 : i32
    %c0_i32_1 = arith.constant 0 : i32
    return %c0_i32, %c0_i32_0 : i32, i32
  }
  func.func @transform_2(%arg0: i32) -> (i32, i32) {
    %c0_i32 = arith.constant 0 : i32
    %c0_i32_0 = arith.constant 0 : i32
    %c0_i32_1 = arith.constant 0 : i32
    return %c0_i32, %c0_i32_0 : i32, i32
  }
  func.func @transform_3(%arg0: i32) -> (i32, i32) {
    %c0_i32 = arith.constant 0 : i32
    %c0_i32_0 = arith.constant 0 : i32
    %c0_i32_1 = arith.constant 0 : i32
    return %c0_i32, %c0_i32_0 : i32, i32
  }
  func.func @transform_4(%arg0: i32) -> (i32, i32) {
    %c0_i32 = arith.constant 0 : i32
    %c0_i32_0 = arith.constant 0 : i32
    %c0_i32_1 = arith.constant 0 : i32
    return %c0_i32, %c0_i32_0 : i32, i32
  }
  func.func @transform_5(%arg0: i32) -> (i32, i32) {
    %c0_i32 = arith.constant 0 : i32
    %c0_i32_0 = arith.constant 0 : i32
    return %arg0, %c0_i32 : i32, i32
  }
}

</mosaic_0001>

<llo_original>
// kernel: _net_forward_impl.1
$region0: #{_net_forward_impl.1}
  #allocation0 [shape = 'u32[]', space=smem, size = 0x4, offset = 0x4, fixed_abs, tag = 'smem constant byte address 0x4 - core index']
  #allocation1 [shape = 'u32[144,128]{1,0:T(1,128)}', space=vmem, size = 0x12000, scoped, tag = 'internal scratch']
  %s0 = inlined_call_operand.hbm [shape: f32[8,16], index: 0, kind: input, shape index: {}]
  %s1 = inlined_call_operand.hbm [shape: f32[16,128], index: 1, kind: input, shape index: {}]
  %s2 = inlined_call_operand.vmem [shape: f32[1,128], index: 2, kind: input, shape index: {}]
  %s3 = inlined_call_operand.hbm [shape: f32[128,128], index: 3, kind: input, shape index: {}]
  %s4 = inlined_call_operand.vmem [shape: f32[1,128], index: 4, kind: input, shape index: {}]
  %s5 = inlined_call_operand.vmem [shape: f32[8,128], index: 5, kind: output, shape index: {}]
  %s6 = sld [smem:[#allocation0]]
  $region42: #{_net_forward_impl.1} parent=0
    _
  %s8 = ssub.s32 1, %s6
  %s9 = scalar_select 0, %s8, %s6
  $region1: #{_net_forward_impl.1} parent=0
    #allocation2 [shape = 'u8[4096]{0}', space=vmem, size = 0x1000, scoped, tag = 'input window, operand 0, single buffered']
    #allocation3 [shape = 's32[1]{0}', space=sflag, size = 0x4, scoped, tag = 'scoped memory for _net_forward_impl.1']
    #allocation4 [shape = 'u8[8192]{0}', space=vmem, size = 0x2000, scoped, tag = 'input window, operand 1, single buffered']
    #allocation5 [shape = 's32[1]{0}', space=sflag, size = 0x4, scoped, tag = 'scoped memory for _net_forward_impl.1']
    #allocation6 [shape = 'u8[65536]{0}', space=vmem, size = 0x10000, scoped, tag = 'input window, operand 3, single buffered']
    %10 = vsyncpa [#allocation3], 0
    %11 = vsyncpa [#allocation5], 0
    // Predicated region
    $region2: #{_net_forward_impl.1} parent=1 // pred_check
      _
    $region3: #{_net_forward_impl.1} parent=1 // pred_check_branch
      %13 = sbr.rel (0) target = $region5
    $region4: #{_net_forward_impl.1} parent=1 // pred_region
      %s15 = ssub.s32 128, 128
      %16 = vsyncadd [#allocation3], %s15
      %s18 = sshll.u32 [#allocation2], 4
      %s19 = int_to_ptr.vmem [resolvable:$true] %s18
      %21 = dma.hbm_to_vmem [thread:$0]  %s0, 128, %s19, [#allocation3]
    $region5: #{_net_forward_impl.1} parent=1 // pred_fallthru
      _
    // Predicated region
    $region6: #{_net_forward_impl.1} parent=1 // pred_check
      _
    $region7: #{_net_forward_impl.1} parent=1 // pred_check_branch
      %23 = sbr.rel (0) target = $region9
    $region8: #{_net_forward_impl.1} parent=1 // pred_region
      %s25 = ssub.s32 256, 256
      %26 = vsyncadd [#allocation5], %s25
      %s27 = sshll.u32 [#allocation4], 4
      %s28 = int_to_ptr.vmem [resolvable:$true] %s27
      %33 = dma.hbm_to_vmem [thread:$0]  %s1, 256, %s28, [#allocation5], 128, 128, 8
    $region9: #{_net_forward_impl.1} parent=1 // pred_fallthru
      _
    // Predicated region
    $region10: #{_net_forward_impl.1} parent=1 // pred_check
      _
    $region11: #{_net_forward_impl.1} parent=1 // pred_check_branch
      %35 = sbr.rel (0) target = $region13
    $region12: #{_net_forward_impl.1} parent=1 // pred_region
      _
    $region13: #{_net_forward_impl.1} parent=1 // pred_fallthru
      _
    // Predicated region
    $region14: #{_net_forward_impl.1} parent=1 // pred_check
      _
    $region15: #{_net_forward_impl.1} parent=1 // pred_check_branch
      %37 = sbr.rel (0) target = $region17
    $region16: #{_net_forward_impl.1} parent=1 // pred_region
      %s39 = ssub.s32 2048, 2048
      %40 = vsyncadd [#allocation5], %s39
      %s41 = sshll.u32 [#allocation6], 4
      %s42 = int_to_ptr.vmem [resolvable:$true] %s41
      %47 = dma.hbm_to_vmem [thread:$0]  %s3, 2048, %s42, [#allocation5], 128, 128, 8
    $region17: #{_net_forward_impl.1} parent=1 // pred_fallthru
      _
    // Predicated region
    $region18: #{_net_forward_impl.1} parent=1 // pred_check
      _
    $region19: #{_net_forward_impl.1} parent=1 // pred_check_branch
      %49 = sbr.rel (0) target = $region21
    $region20: #{_net_forward_impl.1} parent=1 // pred_region
      _
    $region21: #{_net_forward_impl.1} parent=1 // pred_fallthru
      _
    // Predicated region
    $region22: #{_net_forward_impl.1} parent=1 // pred_check
      _
    $region23: #{_net_forward_impl.1} parent=1 // pred_check_branch
      %51 = sbr.rel (0) target = $region25
    $region24: #{_net_forward_impl.1} parent=1 // pred_region
      %52 = dma.done [#allocation3], 128
    $region25: #{_net_forward_impl.1} parent=1 // pred_fallthru
      _
    // Predicated region
    $region26: #{_net_forward_impl.1} parent=1 // pred_check
      _
    $region27: #{_net_forward_impl.1} parent=1 // pred_check_branch
      %54 = sbr.rel (0) target = $region29
    $region28: #{_net_forward_impl.1} parent=1 // pred_region
      %55 = dma.done [#allocation5], 256
    $region29: #{_net_forward_impl.1} parent=1 // pred_fallthru
      _
    // Predicated region
    $region30: #{_net_forward_impl.1} parent=1 // pred_check
      _
    $region31: #{_net_forward_impl.1} parent=1 // pred_check_branch
      %57 = sbr.rel (0) target = $region33
    $region32: #{_net_forward_impl.1} parent=1 // pred_region
      %58 = dma.done [#allocation5], 2048
    $region33: #{_net_forward_impl.1} parent=1 // pred_fallthru
      _
    %v59 = vld [vmem:[#allocation2] sm:$0xff]
    %v60 = vld [vmem:[#allocation4] sm:$0xff]
    %v61 = vld [vmem:[#allocation4 + $0x8] sm:$0xff]
    %v62 = vld [vmem:[%s2] sm:$0x1]
    %v64 = vlaneseq
    %v65 = vshrl.u32 %v64, 7
    %v66 = vsub.s32 0, %v65
    %v67 = vrot.slane %v62, %v66
    %vm69 = vcmask 130048
    %v71 = vsel %vm69, %v59, 0
    %73 = vmatprep.subr.mxu0 0.0
    %74 = vmatpush1.msra.mxu0 0.0
    %75 = vmatprep.subr.mxu0 0.0
    %76 = vmatpush1.msra.mxu0 0.0
    %77 = vmatprep.subr.mxu0 0.0
    %78 = vmatpush1.msra.mxu0 0.0
    %79 = vmatprep.subr.mxu0 0.0
    %80 = vmatpush1.msra.mxu0 0.0
    %81 = vmatprep.subr.mxu0 0.0
    %82 = vmatpush1.msra.mxu0 0.0
    %83 = vmatprep.subr.mxu0 0.0
    %84 = vmatpush1.msra.mxu0 0.0
    %85 = vmatprep.subr.mxu0 0.0
    %86 = vmatpush1.msra.mxu0 0.0
    %87 = vmatprep.subr.mxu0 0.0
    %88 = vmatpush1.msra.mxu0 0.0
    %89 = vmatprep.subr.mxu0 0.0
    %90 = vmatpush1.msra.mxu0 0.0
    %91 = vmatprep.subr.mxu0 0.0
    %92 = vmatpush1.msra.mxu0 0.0
    %93 = vmatprep.subr.mxu0 0.0
    %94 = vmatpush1.msra.mxu0 0.0
    %95 = vmatprep.subr.mxu0 0.0
    %96 = vmatpush1.msra.mxu0 0.0
    %97 = vmatprep.subr.mxu0 0.0
    %98 = vmatpush1.msra.mxu0 0.0
    %99 = vmatprep.subr.mxu0 0.0
    %100 = vmatpush1.msra.mxu0 0.0
    %101 = vmatprep.subr.mxu0 0.0
    %102 = vmatpush1.msra.mxu0 %v61
    %103 = vmatprep.subr.mxu0 0.0
    %104 = vmatpush1.msra.mxu0 %v60
    %105 = vmatprep.subr.mxu0 0.0
    %106 = vmatpush2.msra.mxu0 0.0
    %107 = vmatprep.subr.mxu0 0.0
    %108 = vmatpush2.msra.mxu0 0.0
    %109 = vmatprep.subr.mxu0 0.0
    %110 = vmatpush2.msra.mxu0 0.0
    %111 = vmatprep.subr.mxu0 0.0
    %112 = vmatpush2.msra.mxu0 0.0
    %113 = vmatprep.subr.mxu0 0.0
    %114 = vmatpush2.msra.mxu0 0.0
    %115 = vmatprep.subr.mxu0 0.0
    %116 = vmatpush2.msra.mxu0 0.0
    %117 = vmatprep.subr.mxu0 0.0
    %118 = vmatpush2.msra.mxu0 0.0
    %119 = vmatprep.subr.mxu0 0.0
    %120 = vmatpush2.msra.mxu0 0.0
    %121 = vmatprep.subr.mxu0 0.0
    %122 = vmatpush2.msra.mxu0 0.0
    %123 = vmatprep.subr.mxu0 0.0
    %124 = vmatpush2.msra.mxu0 0.0
    %125 = vmatprep.subr.mxu0 0.0
    %126 = vmatpush2.msra.mxu0 0.0
    %127 = vmatprep.subr.mxu0 0.0
    %128 = vmatpush2.msra.mxu0 0.0
    %129 = vmatprep.subr.mxu0 0.0
    %130 = vmatpush2.msra.mxu0 0.0
    %131 = vmatprep.subr.mxu0 0.0
    %132 = vmatpush2.msra.mxu0 0.0
    %133 = vmatprep.subr.mxu0 0.0
    %134 = vmatpush2.msra.mxu0 0.0
    %135 = vmatprep.subr.mxu0 0.0
    %136 = vmatpush2.msra.mxu0 0.0
    %137 = vmatprep.mubr.f32.mxu0 0.0
    %138 = vmatmul.mubr.f32.gmra.mxu0 %v71
    %v139 = vpop.f32.mrf.mxu0
    %v140 = vadd.f32 %v67, %v139
    %v141 = vpop.f32.mrf.mxu0
    %142 = vdwg.mxu0
    %v143 = vmax.f32 %v140, 0.0
    %v144 = vld [vmem:[#allocation6] sm:$0xff]
    %v145 = vld [vmem:[#allocation6 + $0x8] sm:$0xff]
    %v146 = vld [vmem:[#allocation6 + $0x10] sm:$0xff]
    %v147 = vld [vmem:[#allocation6 + $0x18] sm:$0xff]
    %v148 = vld [vmem:[#allocation6 + $0x20] sm:$0xff]
    %v149 = vld [vmem:[#allocation6 + $0x28] sm:$0xff]
    %v150 = vld [vmem:[#allocation6 + $0x30] sm:$0xff]
    %v151 = vld [vmem:[#allocation6 + $0x38] sm:$0xff]
    %v152 = vld [vmem:[#allocation6 + $0x40] sm:$0xff]
    %v153 = vld [vmem:[#allocation6 + $0x48] sm:$0xff]
    %v154 = vld [vmem:[#allocation6 + $0x50] sm:$0xff]
    %v155 = vld [vmem:[#allocation6 + $0x58] sm:$0xff]
    %v156 = vld [vmem:[#allocation6 + $0x60] sm:$0xff]
    %v157 = vld [vmem:[#allocation6 + $0x68] sm:$0xff]
    %v158 = vld [vmem:[#allocation6 + $0x70] sm:$0xff]
    %v159 = vld [vmem:[#allocation6 + $0x78] sm:$0xff]
    %v160 = vld [vmem:[%s4] sm:$0x1]
    %v162 = vlaneseq
    %v163 = vshrl.u32 %v162, 7
    %v164 = vsub.s32 0, %v163
    %v165 = vrot.slane %v160, %v164
    %167 = vmatprep.subr.mxu0 0.0
    %168 = vmatpush1.msra.mxu0 %v159
    %169 = vmatprep.subr.mxu0 0.0
    %170 = vmatpush1.msra.mxu0 %v158
    %171 = vmatprep.subr.mxu0 0.0
    %172 = vmatpush1.msra.mxu0 %v157
    %173 = vmatprep.subr.mxu0 0.0
    %174 = vmatpush1.msra.mxu0 %v156
    %175 = vmatprep.subr.mxu0 0.0
    %176 = vmatpush1.msra.mxu0 %v155
    %177 = vmatprep.subr.mxu0 0.0
    %178 = vmatpush1.msra.mxu0 %v154
    %179 = vmatprep.subr.mxu0 0.0
    %180 = vmatpush1.msra.mxu0 %v153
    %181 = vmatprep.subr.mxu0 0.0
    %182 = vmatpush1.msra.mxu0 %v152
    %183 = vmatprep.subr.mxu0 0.0
    %184 = vmatpush1.msra.mxu0 %v151
    %185 = vmatprep.subr.mxu0 0.0
    %186 = vmatpush1.msra.mxu0 %v150
    %187 = vmatprep.subr.mxu0 0.0
    %188 = vmatpush1.msra.mxu0 %v149
    %189 = vmatprep.subr.mxu0 0.0
    %190 = vmatpush1.msra.mxu0 %v148
    %191 = vmatprep.subr.mxu0 0.0
    %192 = vmatpush1.msra.mxu0 %v147
    %193 = vmatprep.subr.mxu0 0.0
    %194 = vmatpush1.msra.mxu0 %v146
    %195 = vmatprep.subr.mxu0 0.0
    %196 = vmatpush1.msra.mxu0 %v145
    %197 = vmatprep.subr.mxu0 0.0
    %198 = vmatpush1.msra.mxu0 %v144
    %199 = vmatprep.subr.mxu0 0.0
    %200 = vmatpush2.msra.mxu0 0.0
    %201 = vmatprep.subr.mxu0 0.0
    %202 = vmatpush2.msra.mxu0 0.0
    %203 = vmatprep.subr.mxu0 0.0
    %204 = vmatpush2.msra.mxu0 0.0
    %205 = vmatprep.subr.mxu0 0.0
    %206 = vmatpush2.msra.mxu0 0.0
    %207 = vmatprep.subr.mxu0 0.0
    %208 = vmatpush2.msra.mxu0 0.0
    %209 = vmatprep.subr.mxu0 0.0
    %210 = vmatpush2.msra.mxu0 0.0
    %211 = vmatprep.subr.mxu0 0.0
    %212 = vmatpush2.msra.mxu0 0.0
    %213 = vmatprep.subr.mxu0 0.0
    %214 = vmatpush2.msra.mxu0 0.0
    %215 = vmatprep.subr.mxu0 0.0
    %216 = vmatpush2.msra.mxu0 0.0
    %217 = vmatprep.subr.mxu0 0.0
    %218 = vmatpush2.msra.mxu0 0.0
    %219 = vmatprep.subr.mxu0 0.0
    %220 = vmatpush2.msra.mxu0 0.0
    %221 = vmatprep.subr.mxu0 0.0
    %222 = vmatpush2.msra.mxu0 0.0
    %223 = vmatprep.subr.mxu0 0.0
    %224 = vmatpush2.msra.mxu0 0.0
    %225 = vmatprep.subr.mxu0 0.0
    %226 = vmatpush2.msra.mxu0 0.0
    %227 = vmatprep.subr.mxu0 0.0
    %228 = vmatpush2.msra.mxu0 0.0
    %229 = vmatprep.subr.mxu0 0.0
    %230 = vmatpush2.msra.mxu0 0.0
    %231 = vmatprep.mubr.f32.mxu0 0.0
    %232 = vmatmul.mubr.f32.gmra.mxu0 %v143
    %v233 = vpop.f32.mrf.mxu0
    %v234 = vadd.f32 %v165, %v233
    %v235 = vpop.f32.mrf.mxu0
    %236 = vdwg.mxu0
    %237 = vst [vmem:[%s5] sm:$0xff] %v234
    // Predicated region
    $region34: #{_net_forward_impl.1} parent=1 // pred_check
      _
    $region35: #{_net_forward_impl.1} parent=1 // pred_check_branch
      %239 = sbr.rel (0) target = $region37
    $region36: #{_net_forward_impl.1} parent=1 // pred_region
      _
    $region37: #{_net_forward_impl.1} parent=1 // pred_fallthru
      _
    // Predicated region
    $region38: #{_net_forward_impl.1} parent=1 // pred_check
      _
    $region39: #{_net_forward_impl.1} parent=1 // pred_check_branch
      %241 = sbr.rel (0) target = $region41
    $region40: #{_net_forward_impl.1} parent=1 // pred_region
      _
    $region41: #{_net_forward_impl.1} parent=1 // pred_fallthru
      _
    %242 = vsyncpa [#allocation3], 1
    %243 = vsyncpa [#allocation5], 1

</llo_original>
